<compile_context>
chip_gen: v5e
topology: v5e:2x2
jax: 0.10.0
libtpu: 0.0.40
codegen_flags: <defaults>
</compile_context>

<pallas_src>
import functools

import jax
import jax.numpy as jnp
from jax.experimental import pallas as pl
from jax.experimental.pallas import tpu as pltpu

_LN_EPS = 1e-5


def _round_up(x, m):
    return ((x + m - 1) // m) * m


def _pick_tiling(batch, desired_block_n):
    """Pad batch only to a multiple of 128 and pick the largest lane tile
    (multiple of 128, <= desired) dividing the padded batch.  When the padded
    batch has >= 2 tiles of 128, prefer >= 2 grid steps so v7x's two
    TensorCores both get work (extra step cost on v5e/v6e is ~0.35 us)."""
    b_pad = _round_up(batch, 128)
    n128 = b_pad // 128
    want_steps = 2 if n128 >= 2 else 1
    dmax = max(1, min(desired_block_n // 128, n128 // want_steps))
    d = next(dd for dd in range(dmax, 0, -1) if n128 % dd == 0)
    return b_pad, 128 * d


# ---------------------------------------------------------------------------
# Kernel
# ---------------------------------------------------------------------------
def _lnmlp_kernel(x_ref, w_ref, b_ref, o_ref, *, in_size, h0, h1, out_size, p):
    """Fused Linear->ReLU->LN -> Linear->ReLU->LN -> Linear on one batch tile.

    Layout: batch on the lane (last) axis, features on sublanes.
      x_ref: [block_n, in_size]  native-layout input tile (no HBM transpose)
      w_ref: [3, p, p]           zero-padded weights (torch (out, in) layout,
                                 LN gammas already folded in)
      b_ref: [3, p, 1]           zero-padded bias columns (LN betas folded in)
      o_ref: [out_size, block_n]
    """

    def ln_over_features(h, n_feat):
        # LayerNorm over the feature (sublane) axis.  Padded feature rows of h
        # are exactly zero, so sums over all `p` rows equal sums over the
        # `n_feat` real rows; each centered padded row contributes mean^2 to
        # the sum of squares, which is subtracted back out.
        inv_n = 1.0 / n_feat
        mean = jnp.sum(h, axis=0, keepdims=True) * inv_n
        c = h - mean
        ssq = jnp.sum(c * c, axis=0, keepdims=True)
        var = (ssq - (p - n_feat) * mean * mean) * inv_n
        var = jnp.maximum(var, 0.0)          # guard FP cancellation when p > n_feat
        return c * jax.lax.rsqrt(var + _LN_EPS)

    x = x_ref[...]                           # [block_n, in_size]
    w0 = w_ref[0][:, :in_size]               # static slice of resident slab (free)

    # Layer 0: on-chip reorientation.  W0 @ x^T -> [p, block_n]; batch lands on
    # the lane axis, so all following VPU / LN / store work is lane-dense.
    h = jax.lax.dot_general(
        w0, x, dimension_numbers=(((1,), (1,)), ((), ())),
        preferred_element_type=jnp.float32) + b_ref[0]
    h = ln_over_features(jnp.maximum(h, 0.0), h0)       # LN affine folded into layer 1

    # Layer 1: Linear -> ReLU -> LayerNorm (affine folded into layer 2)
    h = jnp.dot(w_ref[1], h, preferred_element_type=jnp.float32) + b_ref[1]
    h = ln_over_features(jnp.maximum(h, 0.0), h1)

    # Output layer: Linear
    o = jnp.dot(w_ref[2], h, preferred_element_type=jnp.float32) + b_ref[2]
    o_ref[...] = o[:out_size, :].astype(o_ref.dtype)


# ---------------------------------------------------------------------------
# Wrapper
# ---------------------------------------------------------------------------
def lnmlp_forward(x, kernel_params, *, block_n=8192):
    """Run the fused LNMLP forward pass.

    x: [batch, input_size] float32 (native layout; no HBM pre-transpose).
    kernel_params: dict from prepare_kernel_params().
    block_n: max batch-tile width on the lane axis (multiple of 128).  The
      actual tile is chosen per batch; 4096-8192 keeps per-step overhead
      negligible while the double-buffered working set stays < ~9 MiB, well
      under scoped VMEM on v5e/v6e/v7x.
    """
    w_slab = kernel_params["w"]          # [3, p, p]
    b_slab = kernel_params["b"]          # [3, p, 1]
    in_size, h0, h1, out_size = kernel_params["sizes"]
    p = w_slab.shape[1]

    batch = x.shape[0]
    assert x.shape[1] == in_size
    assert block_n % 128 == 0 and block_n >= 128

    # Pad batch only to a multiple of 128 (padded rows produce finite garbage
    # columns that are sliced off); no padding / copy when already aligned.
    b_pad, bn = _pick_tiling(batch, block_n)
    if b_pad != batch:
        x = jnp.pad(x, ((0, b_pad - batch), (0, 0)))

    grid = (b_pad // bn,)

    kernel = functools.partial(
        _lnmlp_kernel, in_size=in_size, h0=h0, h1=h1, out_size=out_size, p=p)

    flops = 2 * batch * (in_size * h0 + h0 * h1 + h1 * out_size)
    bytes_accessed = 4 * (b_pad * in_size + b_pad * out_size
                          + int(w_slab.size) + int(b_slab.size))

    out_t = pl.pallas_call(
        kernel,
        out_shape=jax.ShapeDtypeStruct((out_size, b_pad), jnp.float32),
        grid_spec=pltpu.PrefetchScalarGridSpec(
            num_scalar_prefetch=0,
            grid=grid,
            in_specs=[
                # Native [batch_tile, in_size] input tile; in_size equals the
                # full minor dim, so the (8,128) rule is satisfied.
                # TODO(synk): if xprof on v5e shows exposed input DMA, add
                # pipeline_mode=pl.Buffered(3) on this spec only.
                pl.BlockSpec((bn, in_size), lambda i: (i, 0)),
                # Parameter slabs: constant index_map -> fetched once, kept
                # resident across all grid steps (<20 KB total).
                pl.BlockSpec(w_slab.shape, lambda i: (0, 0, 0)),
                pl.BlockSpec(b_slab.shape, lambda i: (0, 0, 0)),
            ],
            # Lane-dense output tile -> unmasked vst on the tiny out_size axis.
            out_specs=pl.BlockSpec((out_size, bn), lambda i: (0, i)),
        ),
        compiler_params=pltpu.CompilerParams(
            dimension_semantics=("parallel",)),
        cost_estimate=pl.CostEstimate(
            flops=flops,
            transcendentals=2 * batch,          # one rsqrt per LN per row
            bytes_accessed=bytes_accessed),
    )(x, w_slab, b_slab)

    # Back to the module's [batch, out_size] contract.  Consumers that accept
    # [out_size, batch] can use out_t[:, :batch] directly and skip this.
    return out_t[:, :batch].T


# ---------------------------------------------------------------------------
# Parameters (torch-equivalent init + kernel-side folding/packing)
# ---------------------------------------------------------------------------
def init_normc(key, out_size, in_size, gain=1.0):
    """ceem init_normc_: normal(0,1), then scale each row (torch weight is
    (out, in); sum over dim=1) so its L2 norm equals `gain`."""
    w = jax.random.normal(key, (out_size, in_size), dtype=jnp.float32)
    return w * gain / jnp.sqrt(jnp.sum(w ** 2, axis=1, keepdims=True))


def make_lnmlp_params(key, input_size, hidden_sizes, output_size, gain=1.0):
    """Torch-layout parameters matching LNMLP(..., 'relu', ln=True) after
    reset_params(): Linear weights init_normc_, biases 0, LN gamma=1/beta=0."""
    h0, h1 = hidden_sizes
    k0, k1, k2 = jax.random.split(key, 3)
    return dict(
        w0=init_normc(k0, h0, input_size, gain),
        b0=jnp.zeros((h0,), jnp.float32),
        g0=jnp.ones((h0,), jnp.float32), be0=jnp.zeros((h0,), jnp.float32),
        w1=init_normc(k1, h1, h0, gain),
        b1=jnp.zeros((h1,), jnp.float32),
        g1=jnp.ones((h1,), jnp.float32), be1=jnp.zeros((h1,), jnp.float32),
        w2=init_normc(k2, output_size, h1, gain),
        b2=jnp.zeros((output_size,), jnp.float32),
    )


def prepare_kernel_params(raw):
    """Fold LayerNorm affines into the next Linear and pack into two
    zero-padded slabs the kernel keeps resident in VMEM.

        a = gamma * LN(h) + beta
        W a + b = (W * gamma) LN(h) + (W @ beta + b)      (exact)
    """
    w0, b0 = raw["w0"], raw["b0"]
    w1 = raw["w1"] * raw["g0"][None, :]
    b1 = raw["w1"] @ raw["be0"] + raw["b1"]
    w2 = raw["w2"] * raw["g1"][None, :]
    b2 = raw["w2"] @ raw["be1"] + raw["b2"]

    h0, in_size = w0.shape
    h1 = w1.shape[0]
    out_size = w2.shape[0]
    p = _round_up(max(in_size, h0, h1, out_size), 8)

    w_slab = jnp.zeros((3, p, p), jnp.float32)
    w_slab = w_slab.at[0, :h0, :in_size].set(w0)
    w_slab = w_slab.at[1, :h1, :h0].set(w1)
    w_slab = w_slab.at[2, :out_size, :h1].set(w2)

    b_slab = jnp.zeros((3, p, 1), jnp.float32)
    b_slab = b_slab.at[0, :h0, 0].set(b0)
    b_slab = b_slab.at[1, :h1, 0].set(b1)
    b_slab = b_slab.at[2, :out_size, 0].set(b2)

    return dict(w=w_slab, b=b_slab, sizes=(in_size, h0, h1, out_size))


# ---------------------------------------------------------------------------
# Pure-JAX reference (direct transcription of the torch forward)
# ---------------------------------------------------------------------------
def lnmlp_reference(x, raw):
    def layernorm(h, g, be):
        m = jnp.mean(h, axis=-1, keepdims=True)
        v = jnp.mean((h - m) ** 2, axis=-1, keepdims=True)
        return (h - m) * jax.lax.rsqrt(v + _LN_EPS) * g + be

    h = jnp.maximum(x @ raw["w0"].T + raw["b0"], 0.0)
    h = layernorm(h, raw["g0"], raw["be0"])
    h = jnp.maximum(h @ raw["w1"].T + raw["b1"], 0.0)
    h = layernorm(h, raw["g1"], raw["be1"])
    return h @ raw["w2"].T + raw["b2"]


if __name__ == "__main__":
    input_size, hidden_sizes, output_size = 16, [32, 32], 8

    key = jax.random.PRNGKey(0)
    kp, kx0, kx1, kg, kb = jax.random.split(key, 5)

    raw = make_lnmlp_params(kp, input_size, hidden_sizes, output_size, gain=1.0)
    params = prepare_kernel_params(raw)

    # Small batch (single 128-wide tile, grid=(1,)).
    x_small = jax.random.normal(kx0, (8, input_size), dtype=jnp.float32)
    out_small = jax.block_until_ready(lnmlp_forward(x_small, params))
    assert out_small.shape == (8, output_size)
    assert jnp.allclose(out_small, lnmlp_reference(x_small, raw),
                        atol=1e-4, rtol=1e-4), "mismatch vs reference (batch=8)"

    # Non-aligned batch: exercises the pad-to-128 + multi-step-grid path.
    x_big = jax.random.normal(kx1, (300, input_size), dtype=jnp.float32)
    out_big = jax.block_until_ready(lnmlp_forward(x_big, params))
    assert out_big.shape == (300, output_size)
    assert jnp.allclose(out_big, lnmlp_reference(x_big, raw),
                        atol=1e-4, rtol=1e-4), "mismatch vs reference (batch=300)"

    # Exercise the LayerNorm-affine folding with non-default gamma/beta
    # (the module default is gamma=1 / beta=0; the fold is exact either way).
    raw2 = dict(raw)
    raw2["g0"] = 1.0 + 0.1 * jax.random.normal(kg, (hidden_sizes[0],), jnp.float32)
    raw2["be0"] = 0.1 * jax.random.normal(kb, (hidden_sizes[0],), jnp.float32)
    out2 = jax.block_until_ready(
        lnmlp_forward(x_small, prepare_kernel_params(raw2)))
    assert jnp.allclose(out2, lnmlp_reference(x_small, raw2),
                        atol=1e-4, rtol=1e-4), \
        "mismatch vs reference (folded LN affine)"

    print("KERNEL_OK")
</pallas_src>

<mosaic_0001>
module attributes {stable_mosaic.version = 11 : i64} {
  func.func @_lnmlp_kernel(%arg0: i32, %arg1: memref<128x16xf32, #tpu.memory_space<vmem>>, %arg2: memref<3x32x32xf32, #tpu.memory_space<vmem>>, %arg3: memref<3x32x1xf32, #tpu.memory_space<vmem>>, %arg4: memref<8x128xf32, #tpu.memory_space<vmem>>) attributes {dimension_semantics = [#tpu.dimension_semantics<parallel>], iteration_bounds = array<i64: 1>, scalar_prefetch = 0 : i64, scratch_operands = 0 : i64, tpu.core_type = #tpu.core_type<tc>, window_params = [{transform_indices = @transform_0, window_bounds = array<i64: 128, 16>}, {pipeline_mode = #tpu.pipeline_mode<synchronous>, transform_indices = @transform_1, window_bounds = array<i64: 3, 32, 32>}, {pipeline_mode = #tpu.pipeline_mode<synchronous>, transform_indices = @transform_2, window_bounds = array<i64: 3, 32, 1>}, {transform_indices = @transform_3, window_bounds = array<i64: 8, 128>}]} {
    %c0 = arith.constant 0 : index
    %c0_0 = arith.constant 0 : index
    %0 = vector.load %arg1[%c0, %c0_0] : memref<128x16xf32, #tpu.memory_space<vmem>>, vector<128x16xf32>
    %c0_1 = arith.constant 0 : index
    %c0_2 = arith.constant 0 : index
    %c0_3 = arith.constant 0 : index
    %1 = vector.load %arg2[%c0_1, %c0_2, %c0_3] : memref<3x32x32xf32, #tpu.memory_space<vmem>>, vector<1x32x32xf32>
    %2 = vector.shape_cast %1 : vector<1x32x32xf32> to vector<32x32xf32>
    %3 = vector.extract_strided_slice %2 {offsets = [0, 0], sizes = [32, 16], strides = [1, 1]} : vector<32x32xf32> to vector<32x16xf32>
    %cst = arith.constant dense<0.000000e+00> : vector<32x128xf32>
    %4 = tpu.matmul %3, %0, %cst {dimension_numbers = #tpu.dot_dimension_numbers<[1], [1], [0], [0], [0, 0, 1, 0], [], []>} : vector<32x16xf32>, vector<128x16xf32>, vector<32x128xf32> -> vector<32x128xf32>
    %c0_4 = arith.constant 0 : index
    %c0_5 = arith.constant 0 : index
    %c0_6 = arith.constant 0 : index
    %5 = vector.load %arg3[%c0_4, %c0_5, %c0_6] : memref<3x32x1xf32, #tpu.memory_space<vmem>>, vector<1x32x1xf32>
    %6 = vector.shape_cast %5 : vector<1x32x1xf32> to vector<32x1xf32>
    %7 = vector.broadcast %6 : vector<32x1xf32> to vector<32x128xf32>
    %8 = arith.addf %4, %7 : vector<32x128xf32>
    %cst_7 = arith.constant 0.000000e+00 : f32
    %9 = vector.broadcast %cst_7 : f32 to vector<32x128xf32>
    %10 = arith.maximumf %8, %9 : vector<32x128xf32>
    %cst_8 = arith.constant dense<0.000000e+00> : vector<128xf32>
    %11 = vector.multi_reduction <add>, %10, %cst_8 [0] : vector<32x128xf32> to vector<128xf32>
    %12 = vector.shape_cast %11 : vector<128xf32> to vector<1x128xf32>
    %cst_9 = arith.constant 3.125000e-02 : f32
    %13 = vector.broadcast %cst_9 : f32 to vector<1x128xf32>
    %14 = arith.mulf %12, %13 : vector<1x128xf32>
    %15 = vector.broadcast %14 : vector<1x128xf32> to vector<32x128xf32>
    %16 = arith.subf %10, %15 : vector<32x128xf32>
    %17 = arith.mulf %16, %16 : vector<32x128xf32>
    %cst_10 = arith.constant dense<0.000000e+00> : vector<128xf32>
    %18 = vector.multi_reduction <add>, %17, %cst_10 [0] : vector<32x128xf32> to vector<128xf32>
    %19 = vector.shape_cast %18 : vector<128xf32> to vector<1x128xf32>
    %cst_11 = arith.constant 0.000000e+00 : f32
    %20 = vector.broadcast %cst_11 : f32 to vector<1x128xf32>
    %21 = arith.mulf %20, %14 : vector<1x128xf32>
    %22 = arith.mulf %21, %14 : vector<1x128xf32>
    %23 = arith.subf %19, %22 : vector<1x128xf32>
    %cst_12 = arith.constant 3.125000e-02 : f32
    %24 = vector.broadcast %cst_12 : f32 to vector<1x128xf32>
    %25 = arith.mulf %23, %24 : vector<1x128xf32>
    %cst_13 = arith.constant 0.000000e+00 : f32
    %26 = vector.broadcast %cst_13 : f32 to vector<1x128xf32>
    %27 = arith.maximumf %25, %26 : vector<1x128xf32>
    %cst_14 = arith.constant 9.99999974E-6 : f32
    %28 = vector.broadcast %cst_14 : f32 to vector<1x128xf32>
    %29 = arith.addf %27, %28 : vector<1x128xf32>
    %30 = math.rsqrt %29 : vector<1x128xf32>
    %31 = vector.broadcast %30 : vector<1x128xf32> to vector<32x128xf32>
    %32 = arith.mulf %16, %31 : vector<32x128xf32>
    %c1 = arith.constant 1 : index
    %c0_15 = arith.constant 0 : index
    %c0_16 = arith.constant 0 : index
    %33 = vector.load %arg2[%c1, %c0_15, %c0_16] : memref<3x32x32xf32, #tpu.memory_space<vmem>>, vector<1x32x32xf32>
    %34 = vector.shape_cast %33 : vector<1x32x32xf32> to vector<32x32xf32>
    %cst_17 = arith.constant dense<0.000000e+00> : vector<32x128xf32>
    %35 = tpu.matmul %34, %32, %cst_17 {dimension_numbers = #tpu.dot_dimension_numbers<[1], [0], [0], [1], [0, 0, 1, 1], [], []>} : vector<32x32xf32>, vector<32x128xf32>, vector<32x128xf32> -> vector<32x128xf32>
    %c1_18 = arith.constant 1 : index
    %c0_19 = arith.constant 0 : index
    %c0_20 = arith.constant 0 : index
    %36 = vector.load %arg3[%c1_18, %c0_19, %c0_20] : memref<3x32x1xf32, #tpu.memory_space<vmem>>, vector<1x32x1xf32>
    %37 = vector.shape_cast %36 : vector<1x32x1xf32> to vector<32x1xf32>
    %38 = vector.broadcast %37 : vector<32x1xf32> to vector<32x128xf32>
    %39 = arith.addf %35, %38 : vector<32x128xf32>
    %cst_21 = arith.constant 0.000000e+00 : f32
    %40 = vector.broadcast %cst_21 : f32 to vector<32x128xf32>
    %41 = arith.maximumf %39, %40 : vector<32x128xf32>
    %cst_22 = arith.constant dense<0.000000e+00> : vector<128xf32>
    %42 = vector.multi_reduction <add>, %41, %cst_22 [0] : vector<32x128xf32> to vector<128xf32>
    %43 = vector.shape_cast %42 : vector<128xf32> to vector<1x128xf32>
    %cst_23 = arith.constant 3.125000e-02 : f32
    %44 = vector.broadcast %cst_23 : f32 to vector<1x128xf32>
    %45 = arith.mulf %43, %44 : vector<1x128xf32>
    %46 = vector.broadcast %45 : vector<1x128xf32> to vector<32x128xf32>
    %47 = arith.subf %41, %46 : vector<32x128xf32>
    %48 = arith.mulf %47, %47 : vector<32x128xf32>
    %cst_24 = arith.constant dense<0.000000e+00> : vector<128xf32>
    %49 = vector.multi_reduction <add>, %48, %cst_24 [0] : vector<32x128xf32> to vector<128xf32>
    %50 = vector.shape_cast %49 : vector<128xf32> to vector<1x128xf32>
    %cst_25 = arith.constant 0.000000e+00 : f32
    %51 = vector.broadcast %cst_25 : f32 to vector<1x128xf32>
    %52 = arith.mulf %51, %45 : vector<1x128xf32>
    %53 = arith.mulf %52, %45 : vector<1x128xf32>
    %54 = arith.subf %50, %53 : vector<1x128xf32>
    %cst_26 = arith.constant 3.125000e-02 : f32
    %55 = vector.broadcast %cst_26 : f32 to vector<1x128xf32>
    %56 = arith.mulf %54, %55 : vector<1x128xf32>
    %cst_27 = arith.constant 0.000000e+00 : f32
    %57 = vector.broadcast %cst_27 : f32 to vector<1x128xf32>
    %58 = arith.maximumf %56, %57 : vector<1x128xf32>
    %cst_28 = arith.constant 9.99999974E-6 : f32
    %59 = vector.broadcast %cst_28 : f32 to vector<1x128xf32>
    %60 = arith.addf %58, %59 : vector<1x128xf32>
    %61 = math.rsqrt %60 : vector<1x128xf32>
    %62 = vector.broadcast %61 : vector<1x128xf32> to vector<32x128xf32>
    %63 = arith.mulf %47, %62 : vector<32x128xf32>
    %c2 = arith.constant 2 : index
    %c0_29 = arith.constant 0 : index
    %c0_30 = arith.constant 0 : index
    %64 = vector.load %arg2[%c2, %c0_29, %c0_30] : memref<3x32x32xf32, #tpu.memory_space<vmem>>, vector<1x32x32xf32>
    %65 = vector.shape_cast %64 : vector<1x32x32xf32> to vector<32x32xf32>
    %cst_31 = arith.constant dense<0.000000e+00> : vector<32x128xf32>
    %66 = tpu.matmul %65, %63, %cst_31 {dimension_numbers = #tpu.dot_dimension_numbers<[1], [0], [0], [1], [0, 0, 1, 1], [], []>} : vector<32x32xf32>, vector<32x128xf32>, vector<32x128xf32> -> vector<32x128xf32>
    %c2_32 = arith.constant 2 : index
    %c0_33 = arith.constant 0 : index
    %c0_34 = arith.constant 0 : index
    %67 = vector.load %arg3[%c2_32, %c0_33, %c0_34] : memref<3x32x1xf32, #tpu.memory_space<vmem>>, vector<1x32x1xf32>
    %68 = vector.shape_cast %67 : vector<1x32x1xf32> to vector<32x1xf32>
    %69 = vector.broadcast %68 : vector<32x1xf32> to vector<32x128xf32>
    %70 = arith.addf %66, %69 : vector<32x128xf32>
    %71 = vector.extract_strided_slice %70 {offsets = [0, 0], sizes = [8, 128], strides = [1, 1]} : vector<32x128xf32> to vector<8x128xf32>
    %c0_35 = arith.constant 0 : index
    %c0_36 = arith.constant 0 : index
    %72 = vector.load %arg4[%c0_35, %c0_36] : memref<8x128xf32, #tpu.memory_space<vmem>>, vector<8x128xf32>
    tpu.vector_store %arg4[%c0_35, %c0_36], %71 {strides = array<i32>} : memref<8x128xf32, #tpu.memory_space<vmem>>, vector<8x128xf32>,
    return
  }
  func.func @transform_0(%arg0: i32) -> (i32, i32) {
    %c0_i32 = arith.constant 0 : i32
    %c0_i32_0 = arith.constant 0 : i32
    return %arg0, %c0_i32 : i32, i32
  }
  func.func @transform_1(%arg0: i32) -> (i32, i32, i32) {
    %c0_i32 = arith.constant 0 : i32
    %c0_i32_0 = arith.constant 0 : i32
    %c0_i32_1 = arith.constant 0 : i32
    %c0_i32_2 = arith.constant 0 : i32
    return %c0_i32, %c0_i32_0, %c0_i32_1 : i32, i32, i32
  }
  func.func @transform_2(%arg0: i32) -> (i32, i32, i32) {
    %c0_i32 = arith.constant 0 : i32
    %c0_i32_0 = arith.constant 0 : i32
    %c0_i32_1 = arith.constant 0 : i32
    %c0_i32_2 = arith.constant 0 : i32
    return %c0_i32, %c0_i32_0, %c0_i32_1 : i32, i32, i32
  }
  func.func @transform_3(%arg0: i32) -> (i32, i32) {
    %c0_i32 = arith.constant 0 : i32
    %c0_i32_0 = arith.constant 0 : i32
    return %c0_i32, %arg0 : i32, i32
  }
}

</mosaic_0001>

<llo_original>
// kernel: tpu_custom_call.1
$region0: #{tpu_custom_call.1}
  #allocation0 [shape = 'u32[]', space=smem, size = 0x4, offset = 0x4, fixed_abs, tag = 'smem constant byte address 0x4 - core index']
  #allocation1 [shape = 'u32[72,128]{1,0:T(1,128)}', space=vmem, size = 0x9000, scoped, tag = 'internal scratch']
  %s0 = inlined_call_operand.vmem [shape: f32[128,16], index: 0, kind: input, shape index: {}]
  %s1 = inlined_call_operand.vmem [shape: f32[3,32,32], index: 1, kind: input, shape index: {}]
  %s2 = inlined_call_operand.vmem [shape: f32[3,32,1], index: 2, kind: input, shape index: {}]
  %s3 = inlined_call_operand.hbm [shape: f32[8,128], index: 3, kind: output, shape index: {}]
  %s4 = sld [smem:[#allocation0]]
  $region22: #{tpu_custom_call.1} parent=0
    _
  %s6 = ssub.s32 1, %s4
  %s7 = scalar_select 0, %s6, %s4
  $region1: #{tpu_custom_call.1} parent=0
    #allocation2 [shape = 'u8[4096]{0}', space=vmem, size = 0x1000, scoped, tag = 'output window, operand 0, single buffered']
    #allocation3 [shape = 's32[1]{0}', space=sflag, size = 0x4, scoped, tag = 'scoped memory for tpu_custom_call.1']
    %8 = vsyncpa [#allocation3], 0
    // Predicated region
    $region2: #{tpu_custom_call.1} parent=1 // pred_check
      _
    $region3: #{tpu_custom_call.1} parent=1 // pred_check_branch
      %10 = sbr.rel (0) target = $region5
    $region4: #{tpu_custom_call.1} parent=1 // pred_region
      _
    $region5: #{tpu_custom_call.1} parent=1 // pred_fallthru
      _
    // Predicated region
    $region6: #{tpu_custom_call.1} parent=1 // pred_check
      _
    $region7: #{tpu_custom_call.1} parent=1 // pred_check_branch
      %12 = sbr.rel (0) target = $region9
    $region8: #{tpu_custom_call.1} parent=1 // pred_region
      _
    $region9: #{tpu_custom_call.1} parent=1 // pred_fallthru
      _
    // Predicated region
    $region10: #{tpu_custom_call.1} parent=1 // pred_check
      _
    $region11: #{tpu_custom_call.1} parent=1 // pred_check_branch
      %14 = sbr.rel (0) target = $region13
    $region12: #{tpu_custom_call.1} parent=1 // pred_region
      _
    $region13: #{tpu_custom_call.1} parent=1 // pred_fallthru
      _
    %v15 = vld [vmem:[%s0] sm:$0xff]
    %v16 = vld [vmem:[%s0 + $0x8] sm:$0xff]
    %v17 = vld [vmem:[%s0 + $0x10] sm:$0xff]
    %v18 = vld [vmem:[%s0 + $0x18] sm:$0xff]
    %v19 = vld [vmem:[%s0 + $0x20] sm:$0xff]
    %v20 = vld [vmem:[%s0 + $0x28] sm:$0xff]
    %v21 = vld [vmem:[%s0 + $0x30] sm:$0xff]
    %v22 = vld [vmem:[%s0 + $0x38] sm:$0xff]
    %v23 = vld [vmem:[%s0 + $0x40] sm:$0xff]
    %v24 = vld [vmem:[%s0 + $0x48] sm:$0xff]
    %v25 = vld [vmem:[%s0 + $0x50] sm:$0xff]
    %v26 = vld [vmem:[%s0 + $0x58] sm:$0xff]
    %v27 = vld [vmem:[%s0 + $0x60] sm:$0xff]
    %v28 = vld [vmem:[%s0 + $0x68] sm:$0xff]
    %v29 = vld [vmem:[%s0 + $0x70] sm:$0xff]
    %v30 = vld [vmem:[%s0 + $0x78] sm:$0xff]
    %v31 = vld [vmem:[%s1] sm:$0xff]
    %v32 = vld [vmem:[%s1 + $0x8] sm:$0xff]
    %v33 = vld [vmem:[%s1 + $0x10] sm:$0xff]
    %v34 = vld [vmem:[%s1 + $0x18] sm:$0xff]
    %v35 = vld [vmem:[%s2] sm:$0xff]
    %v36 = vld [vmem:[%s2 + $0x8] sm:$0xff]
    %v37 = vld [vmem:[%s2 + $0x10] sm:$0xff]
    %v38 = vld [vmem:[%s2 + $0x18] sm:$0xff]
    %40 = vset.pattern.permute.xlu0 0
    %41 = vperm.xlu0 %40, %v35
    %v42 = vpop.permute.xlu0 %41
    %45 = vset.pattern.permute.xlu0 0
    %46 = vperm.xlu0 %45, %v36
    %v47 = vpop.permute.xlu0 %46
    %50 = vset.pattern.permute.xlu0 0
    %51 = vperm.xlu0 %50, %v37
    %v52 = vpop.permute.xlu0 %51
    %55 = vset.pattern.permute.xlu0 0
    %56 = vperm.xlu0 %55, %v38
    %v57 = vpop.permute.xlu0 %56
    %vm59 = vcmask 130048
    %v61 = vsel %vm59, %v31, 0
    %v64 = vsel %vm59, %v32, 0
    %v67 = vsel %vm59, %v33, 0
    %v70 = vsel %vm59, %v34, 0
    %v73 = vsel %vm59, %v15, 0
    %v76 = vsel %vm59, %v16, 0
    %v79 = vsel %vm59, %v17, 0
    %v82 = vsel %vm59, %v18, 0
    %v85 = vsel %vm59, %v19, 0
    %v88 = vsel %vm59, %v20, 0
    %v91 = vsel %vm59, %v21, 0
    %v94 = vsel %vm59, %v22, 0
    %v97 = vsel %vm59, %v23, 0
    %v100 = vsel %vm59, %v24, 0
    %v103 = vsel %vm59, %v25, 0
    %v106 = vsel %vm59, %v26, 0
    %v109 = vsel %vm59, %v27, 0
    %v112 = vsel %vm59, %v28, 0
    %v115 = vsel %vm59, %v29, 0
    %v118 = vsel %vm59, %v30, 0
    %120 = vmatpush.xpose.msra.mxu0 %v118
    %121 = vmatpush.xpose.msra.mxu0 %v115
    %122 = vmatpush.xpose.msra.mxu0 %v112
    %123 = vmatpush.xpose.msra.mxu0 %v109
    %124 = vmatpush.xpose.msra.mxu0 %v106
    %125 = vmatpush.xpose.msra.mxu0 %v103
    %126 = vmatpush.xpose.msra.mxu0 %v100
    %127 = vmatpush.xpose.msra.mxu0 %v97
    %128 = vmatpush.xpose.msra.mxu0 %v94
    %129 = vmatpush.xpose.msra.mxu0 %v91
    %130 = vmatpush.xpose.msra.mxu0 %v88
    %131 = vmatpush.xpose.msra.mxu0 %v85
    %132 = vmatpush.xpose.msra.mxu0 %v82
    %133 = vmatpush.xpose.msra.mxu0 %v79
    %134 = vmatpush.xpose.msra.mxu0 %v76
    %135 = vmatpush.xpose.msra.mxu0 %v73
    %136 = vmatmul.f32.gmra.mxu0 %v61
    %v137 = vpop.f32.mrf.mxu0
    %v138 = vadd.f32 %v42, %v137
    %139 = vmatmul.f32.gmra.mxu0 %v64
    %v140 = vpop.f32.mrf.mxu0
    %v141 = vadd.f32 %v47, %v140
    %142 = vmatmul.f32.gmra.mxu0 %v67
    %v143 = vpop.f32.mrf.mxu0
    %v144 = vadd.f32 %v52, %v143
    %145 = vmatmul.f32.gmra.mxu0 %v70
    %v146 = vpop.f32.mrf.mxu0
    %v147 = vadd.f32 %v57, %v146
    %148 = vdwg.mxu0
    %v149 = vmax.f32 %v138, 0.0
    %v150 = vmax.f32 %v141, 0.0
    %v151 = vmax.f32 %v144, 0.0
    %v152 = vmax.f32 %v147, 0.0
    %v153 = vadd.f32 %v149, %v150
    %v154 = vadd.f32 %v153, %v151
    %v155 = vadd.f32 %v154, %v152
    %v156 = vrot.slane %v155, 4
    %v157 = vadd.f32 %v155, %v156
    %v158 = vrot.slane %v157, 2
    %v159 = vadd.f32 %v157, %v158
    %v160 = vrot.slane %v159, 1
    %v161 = vadd.f32 %v159, %v160
    %v162 = vmul.f32 %v161, 0.03125
    %v163 = vsub.f32 %v149, %v162
    %v164 = vsub.f32 %v150, %v162
    %v165 = vsub.f32 %v151, %v162
    %v166 = vsub.f32 %v152, %v162
    %v167 = vmul.f32 %v163, %v163
    %v168 = vmul.f32 %v164, %v164
    %v169 = vmul.f32 %v165, %v165
    %v170 = vmul.f32 %v166, %v166
    %v171 = vadd.f32 %v167, %v168
    %v172 = vadd.f32 %v171, %v169
    %v173 = vadd.f32 %v172, %v170
    %v174 = vrot.slane %v173, 4
    %v175 = vadd.f32 %v173, %v174
    %v176 = vrot.slane %v175, 2
    %v177 = vadd.f32 %v175, %v176
    %v178 = vrot.slane %v177, 1
    %v179 = vadd.f32 %v177, %v178
    %v180 = vmul.f32 %v162, 0.0
    %v181 = vmul.f32 %v180, %v162
    %v182 = vsub.f32 %v179, %v181
    %v183 = vmul.f32 %v182, 0.03125
    %v184 = vmax.f32 %v183, 0.0
    %v185 = vadd.f32 %v184, 1e-05
    %v186 = vrsqrt.pop %v185
    %v187 = vmul.f32 %v186, %v185
    %v188 = vmul.f32 %v187, %v186
    %v189 = vmul.f32 0.5, %v188
    %v190 = vsub.f32 1.5, %v189
    %v191 = vmul.f32 %v186, %v190
    %vm192 = vweird.f32 %v185
    %vm193 = vweird.f32 %v186
    %vm194 = vmor %vm192, %vm193
    %v195 = vsel %vm194, %v186, %v191
    %v196 = vmul.f32 %v163, %v195
    %v197 = vmul.f32 %v164, %v195
    %v198 = vmul.f32 %v165, %v195
    %v199 = vmul.f32 %v166, %v195
    %s200 = scalar_lea.vmem %s1, 32
    %v201 = vld [vmem:[%s200] sm:$0xff]
    %v202 = vld [vmem:[%s200 + $0x8] sm:$0xff]
    %v203 = vld [vmem:[%s200 + $0x10] sm:$0xff]
    %v204 = vld [vmem:[%s200 + $0x18] sm:$0xff]
    %s205 = scalar_lea.vmem %s2, 32
    %v206 = vld [vmem:[%s205] sm:$0xff]
    %v207 = vld [vmem:[%s205 + $0x8] sm:$0xff]
    %v208 = vld [vmem:[%s205 + $0x10] sm:$0xff]
    %v209 = vld [vmem:[%s205 + $0x18] sm:$0xff]
    %211 = vset.pattern.permute.xlu0 0
    %212 = vperm.xlu0 %211, %v206
    %v213 = vpop.permute.xlu0 %212
    %216 = vset.pattern.permute.xlu0 0
    %217 = vperm.xlu0 %216, %v207
    %v218 = vpop.permute.xlu0 %217
    %221 = vset.pattern.permute.xlu0 0
    %222 = vperm.xlu0 %221, %v208
    %v223 = vpop.permute.xlu0 %222
    %226 = vset.pattern.permute.xlu0 0
    %227 = vperm.xlu0 %226, %v209
    %v228 = vpop.permute.xlu0 %227
    %vm230 = vcmask 261120
    %v232 = vsel %vm230, %v201, 0
    %v235 = vsel %vm230, %v202, 0
    %v238 = vsel %vm230, %v203, 0
    %v241 = vsel %vm230, %v204, 0
    %243 = vmatpush.msra.mxu0 0.0
    %244 = vmatpush.msra.mxu0 0.0
    %245 = vmatpush.msra.mxu0 0.0
    %246 = vmatpush.msra.mxu0 0.0
    %247 = vmatpush.msra.mxu0 0.0
    %248 = vmatpush.msra.mxu0 0.0
    %249 = vmatpush.msra.mxu0 0.0
    %250 = vmatpush.msra.mxu0 0.0
    %251 = vmatpush.msra.mxu0 0.0
    %252 = vmatpush.msra.mxu0 0.0
    %253 = vmatpush.msra.mxu0 0.0
    %254 = vmatpush.msra.mxu0 0.0
    %255 = vmatpush.msra.mxu0 %v199
    %256 = vmatpush.msra.mxu0 %v198
    %257 = vmatpush.msra.mxu0 %v197
    %258 = vmatpush.msra.mxu0 %v196
    %259 = vmatmul.f32.gmra.mxu0 %v232
    %v260 = vpop.f32.mrf.mxu0
    %v261 = vadd.f32 %v213, %v260
    %262 = vmatmul.f32.gmra.mxu0 %v235
    %v263 = vpop.f32.mrf.mxu0
    %v264 = vadd.f32 %v218, %v263
    %265 = vmatmul.f32.gmra.mxu0 %v238
    %v266 = vpop.f32.mrf.mxu0
    %v267 = vadd.f32 %v223, %v266
    %268 = vmatmul.f32.gmra.mxu0 %v241
    %v269 = vpop.f32.mrf.mxu0
    %v270 = vadd.f32 %v228, %v269
    %271 = vdwg.mxu0
    %v272 = vmax.f32 %v261, 0.0
    %v273 = vmax.f32 %v264, 0.0
    %v274 = vmax.f32 %v267, 0.0
    %v275 = vmax.f32 %v270, 0.0
    %v276 = vadd.f32 %v272, %v273
    %v277 = vadd.f32 %v276, %v274
    %v278 = vadd.f32 %v277, %v275
    %v279 = vrot.slane %v278, 4
    %v280 = vadd.f32 %v278, %v279
    %v281 = vrot.slane %v280, 2
    %v282 = vadd.f32 %v280, %v281
    %v283 = vrot.slane %v282, 1
    %v284 = vadd.f32 %v282, %v283
    %v285 = vmul.f32 %v284, 0.03125
    %v286 = vsub.f32 %v272, %v285
    %v287 = vsub.f32 %v273, %v285
    %v288 = vsub.f32 %v274, %v285
    %v289 = vsub.f32 %v275, %v285
    %v290 = vmul.f32 %v286, %v286
    %v291 = vmul.f32 %v287, %v287
    %v292 = vmul.f32 %v288, %v288
    %v293 = vmul.f32 %v289, %v289
    %v294 = vadd.f32 %v290, %v291
    %v295 = vadd.f32 %v294, %v292
    %v296 = vadd.f32 %v295, %v293
    %v297 = vrot.slane %v296, 4
    %v298 = vadd.f32 %v296, %v297
    %v299 = vrot.slane %v298, 2
    %v300 = vadd.f32 %v298, %v299
    %v301 = vrot.slane %v300, 1
    %v302 = vadd.f32 %v300, %v301
    %v303 = vmul.f32 %v285, 0.0
    %v304 = vmul.f32 %v303, %v285
    %v305 = vsub.f32 %v302, %v304
    %v306 = vmul.f32 %v305, 0.03125
    %v307 = vmax.f32 %v306, 0.0
    %v308 = vadd.f32 %v307, 1e-05
    %v309 = vrsqrt.pop %v308
    %v310 = vmul.f32 %v309, %v308
    %v311 = vmul.f32 %v310, %v309
    %v312 = vmul.f32 0.5, %v311
    %v313 = vsub.f32 1.5, %v312
    %v314 = vmul.f32 %v309, %v313
    %vm315 = vweird.f32 %v308
    %vm316 = vweird.f32 %v309
    %vm317 = vmor %vm315, %vm316
    %v318 = vsel %vm317, %v309, %v314
    %v319 = vmul.f32 %v286, %v318
    %v320 = vmul.f32 %v287, %v318
    %v321 = vmul.f32 %v288, %v318
    %v322 = vmul.f32 %v289, %v318
    %s323 = scalar_lea.vmem %s1, 64
    %v324 = vld [vmem:[%s323] sm:$0xff]
    %v325 = vld [vmem:[%s323 + $0x8] sm:$0xff]
    %v326 = vld [vmem:[%s323 + $0x10] sm:$0xff]
    %v327 = vld [vmem:[%s323 + $0x18] sm:$0xff]
    %s328 = scalar_lea.vmem %s2, 64
    %v329 = vld [vmem:[%s328] sm:$0xff]
    %v330 = vld [vmem:[%s328 + $0x8] sm:$0xff]
    %v331 = vld [vmem:[%s328 + $0x10] sm:$0xff]
    %v332 = vld [vmem:[%s328 + $0x18] sm:$0xff]
    %334 = vset.pattern.permute.xlu0 0
    %335 = vperm.xlu0 %334, %v329
    %v336 = vpop.permute.xlu0 %335
    %339 = vset.pattern.permute.xlu0 0
    %340 = vperm.xlu0 %339, %v330
    %v341 = vpop.permute.xlu0 %340
    %343 = vset.pattern.permute.xlu0 0
    %344 = vperm.xlu0 %343, %v331
    %v345 = vpop.permute.xlu0 %344
    %347 = vset.pattern.permute.xlu0 0
    %348 = vperm.xlu0 %347, %v332
    %v349 = vpop.permute.xlu0 %348
    %v351 = vsel %vm230, %v324, 0
    %v354 = vsel %vm230, %v325, 0
    %v357 = vsel %vm230, %v326, 0
    %v360 = vsel %vm230, %v327, 0
    %362 = vmatpush.msra.mxu0 0.0
    %363 = vmatpush.msra.mxu0 0.0
    %364 = vmatpush.msra.mxu0 0.0
    %365 = vmatpush.msra.mxu0 0.0
    %366 = vmatpush.msra.mxu0 0.0
    %367 = vmatpush.msra.mxu0 0.0
    %368 = vmatpush.msra.mxu0 0.0
    %369 = vmatpush.msra.mxu0 0.0
    %370 = vmatpush.msra.mxu0 0.0
    %371 = vmatpush.msra.mxu0 0.0
    %372 = vmatpush.msra.mxu0 0.0
    %373 = vmatpush.msra.mxu0 0.0
    %374 = vmatpush.msra.mxu0 %v322
    %375 = vmatpush.msra.mxu0 %v321
    %376 = vmatpush.msra.mxu0 %v320
    %377 = vmatpush.msra.mxu0 %v319
    %378 = vmatmul.f32.gmra.mxu0 %v351
    %v379 = vpop.f32.mrf.mxu0
    %v380 = vadd.f32 %v336, %v379
    %381 = vmatmul.f32.gmra.mxu0 %v354
    %v382 = vpop.f32.mrf.mxu0
    %383 = vmatmul.f32.gmra.mxu0 %v357
    %v384 = vpop.f32.mrf.mxu0
    %385 = vmatmul.f32.gmra.mxu0 %v360
    %v386 = vpop.f32.mrf.mxu0
    %387 = vdwg.mxu0
    %388 = vst [vmem:[#allocation2] sm:$0xff] %v380
    // Predicated region
    $region14: #{tpu_custom_call.1} parent=1 // pred_check
      _
    $region15: #{tpu_custom_call.1} parent=1 // pred_check_branch
      %390 = sbr.rel (0) target = $region17
    $region16: #{tpu_custom_call.1} parent=1 // pred_region
      %392 = vsyncadd [#allocation3], 0
      %s394 = sshll.u32 [#allocation2], 4
      %s395 = int_to_ptr.vmem [resolvable:$true] %s394
      %s396 = sshll.u32 %s3, 4
      %s397 = int_to_ptr.hbm [resolvable:$true] %s396
      %399 = dma.vmem_to_hbm [thread:$0]  %s395, 128, %s397, [#allocation3]
    $region17: #{tpu_custom_call.1} parent=1 // pred_fallthru
      _
    // Predicated region
    $region18: #{tpu_custom_call.1} parent=1 // pred_check
      _
    $region19: #{tpu_custom_call.1} parent=1 // pred_check_branch
      %401 = sbr.rel (0) target = $region21
    $region20: #{tpu_custom_call.1} parent=1 // pred_region
      %403 = dma.done [#allocation3], 128
    $region21: #{tpu_custom_call.1} parent=1 // pred_fallthru
      _
    %404 = vsyncpa [#allocation3], 1

</llo_original>
